<compile_context>
chip_gen: v7x
topology: tpu7x:2x2x1
jax: 0.10.0
libtpu: 0.0.40
codegen_flags: <defaults>
</compile_context>

<pallas_src>
import functools

import jax
import jax.numpy as jnp
from jax import lax
from jax.experimental import pallas as pl
from jax.experimental.pallas import tpu as pltpu


# Tap order shared by the mask builder, the weight reshape and the kernel:
# tap index k = (dh+1)*3 + (dw+1)  <->  (kh, kw) of the PyTorch 3x3 kernel.
_TAPS = tuple((dh, dw) for dh in (-1, 0, 1) for dw in (-1, 0, 1))


# ----------------------------------------------------------------------------
# Fused kernel: conv1 + bn1 + relu + conv2 + bn2 + identity shortcut + relu
# ----------------------------------------------------------------------------
def _make_basic_block_kernel(img_w, tb):
    """img_w: image width (row-major flat spatial axis); tb: images per step."""

    def kernel(x_ref, mask_ref, w1_ref, b1_ref, w2_ref, b2_ref, o_ref):
        # x_ref   : (tb, cin, m_img)     bf16  input tile, m_img = H*W on lanes
        # mask_ref: (9, m_img)           f32   1.0 = tap reads inside the image
        # w1_ref  : (planes, 9*cin)      bf16  conv1 weight, BN1 scale folded in
        # b1_ref  : (planes, 1)          f32   folded BN1 bias
        # w2_ref  : (planes, 9*planes)   bf16  conv2 weight, BN2 scale folded in
        # b2_ref  : (planes, 1)          f32   folded BN2 bias
        # o_ref   : (tb, planes, m_img)  bf16  output tile
        w1 = w1_ref[...]
        w2 = w2_ref[...]
        b1 = b1_ref[...]
        b2 = b2_ref[...]

        # Per-tap validity rows: loaded + compared ONCE per grid step and
        # reused for every image in the tile and for both convolutions.
        valid = [None if (dh, dw) == (0, 0) else (mask_ref[k:k + 1, :] != 0.0)
                 for k, (dh, dw) in enumerate(_TAPS)]

        def im2col(a):
            # a: (C, m_img) bf16 -> (9*C, m_img) bf16 patch matrix.
            # Each 3x3 tap is a static roll of the flattened row-major spatial
            # axis; every wrapped-around position is exactly a zero-padded
            # one, so select-with-mask reproduces the padded convolution.
            # The static-shift roll lowers to two lane slices + a concat
            # (pltpu.roll / XLU rotate is an equivalent alternative where the
            # generation supports packed-bf16 lane rotates).
            blocks = []
            for k, (dh, dw) in enumerate(_TAPS):
                d = dh * img_w + dw
                if d == 0:
                    blocks.append(a)                       # centre tap: always valid
                else:
                    rolled = jnp.roll(a, -d, axis=-1)
                    blocks.append(jnp.where(valid[k], rolled,
                                            jnp.zeros_like(rolled)))
            # NOTE: for large C, scattering each tap into a (9*C, m_img) VMEM
            # scratch (or per-tap dot-accumulation on v5e) avoids this concat
            # copy; at CIFAR channel counts the copy is small and the full-K
            # im2col matmul keeps the deep MXU fed.
            return jnp.concatenate(blocks, axis=0)

        def one_image(t):
            x_t = x_ref[t]                                            # (cin, m_img) bf16
            p1 = im2col(x_t)
            z1 = jnp.dot(w1, p1, preferred_element_type=jnp.float32)  # conv1 (+BN1 scale)
            h1 = jnp.maximum(z1 + b1, 0.0)                            # BN1 bias + ReLU
            p2 = im2col(h1.astype(jnp.bfloat16))
            z2 = jnp.dot(w2, p2, preferred_element_type=jnp.float32)  # conv2 (+BN2 scale)
            out = z2 + b2 + x_t.astype(jnp.float32)                   # identity shortcut
            o_ref[t] = jnp.maximum(out, 0.0).astype(o_ref.dtype)

        if tb <= 8:                       # small tiles: static unroll
            for t in range(tb):
                one_image(t)
        else:                             # big tiles: fori_loop bounds live ranges
            def body(t, carry):
                one_image(t)
                return carry
            lax.fori_loop(0, tb, body, 0)

    return kernel


# ----------------------------------------------------------------------------
# Host-side preparation: BN folding, weight layout, masks, tile selection
# ----------------------------------------------------------------------------
def _fold_bn(gamma, beta, mean, var, eps=1e-5):
    scale = gamma / jnp.sqrt(var + eps)
    return scale, beta - mean * scale


def _conv3x3_weight_mat(w_oihw):
    """PyTorch (Cout, Cin, 3, 3) -> (Cout, 9*Cin), K ordered (tap, cin)."""
    cout, cin = w_oihw.shape[0], w_oihw.shape[1]
    return jnp.transpose(w_oihw, (0, 2, 3, 1)).reshape(cout, 9 * cin)


def _tap_masks(h, w):
    """(9, h*w) f32: 1.0 where tap (dh, dw) reads inside the image, else 0."""
    p = jnp.arange(h * w, dtype=jnp.int32)
    r, c = p // w, p % w
    rows = [((r + dh) >= 0) & ((r + dh) < h) & ((c + dw) >= 0) & ((c + dw) < w)
            for dh, dw in _TAPS]
    return jnp.stack(rows, axis=0).astype(jnp.float32)


def _vmem_capacity_bytes():
    try:
        return int(pltpu.get_tpu_info().vmem_capacity_bytes)
    except Exception:
        return 64 * 1024 * 1024       # conservative: v7x per-TensorCore VMEM


def _select_images_per_tile(n, m_img, cin, planes, vmem_cap):
    """Images per grid step, sized from the actual VMEM capacity (so v5e/v6e
    with 128 MiB pick bigger tiles than v7x with 64 MiB)."""
    budget = (vmem_cap * 3) // 5                        # headroom for compiler scratch
    per_img = (2 * (cin + planes) * m_img * 2           # double-buffered bf16 I/O tiles
               + 9 * (cin + planes) * m_img * 2         # both bf16 patch matrices
               + 6 * planes * m_img * 4                 # f32 intermediates
               + (cin + planes) * m_img * 4)            # slack (casts / epilogue temps)
    tb = max(1, min(n, budget // max(per_img, 1)))
    while n % tb:                                        # whole tiles only
        tb -= 1

    # Keep the 'parallel' grid axis >= 2 steps and even (or >= 4) when the
    # batch allows it, so v7x's two TensorCores get whole, equal shares.
    def _grid_ok(t):
        g = n // t
        return g >= 2 and (g % 2 == 0 or g >= 4)

    while tb > 1 and not _grid_ok(tb):
        tb -= 1
        while n % tb:
            tb -= 1
    return tb


def basic_block_forward(x_nchw, params, *, in_planes, planes, stride=1,
                        option="A"):
    if stride != 1 or in_planes != planes:
        # TODO(synk): downsampling blocks (strided conv1 + option A/B shortcut)
        #             are not wired into the fused kernel.
        raise NotImplementedError(
            "fused BasicBlock kernel covers the identity-shortcut case "
            "(stride == 1, in_planes == planes)")
    del option  # shortcut is the identity in this configuration regardless of option

    n, cin, h, w = x_nchw.shape
    m_img = h * w

    # NCHW -> (N, Cin, H*W): contiguous reshape, no HBM relayout.  In a full
    # network the previous block already produces this bf16 layout, so the
    # cast below also disappears.
    x_flat = x_nchw.reshape(n, cin, m_img).astype(jnp.bfloat16)

    # Fold BN scale into the conv weights in f32 BEFORE the bf16 cast; only
    # the biases remain as (Cout, 1) epilogue operands.
    s1, b1 = _fold_bn(params["bn1_gamma"], params["bn1_beta"],
                      params["bn1_mean"], params["bn1_var"])
    s2, b2 = _fold_bn(params["bn2_gamma"], params["bn2_beta"],
                      params["bn2_mean"], params["bn2_var"])
    w1 = (_conv3x3_weight_mat(params["conv1_w"]).astype(jnp.float32)
          * s1[:, None]).astype(jnp.bfloat16)
    w2 = (_conv3x3_weight_mat(params["conv2_w"]).astype(jnp.float32)
          * s2[:, None]).astype(jnp.bfloat16)
    b1 = b1.reshape(planes, 1).astype(jnp.float32)
    b2 = b2.reshape(planes, 1).astype(jnp.float32)

    masks = _tap_masks(h, w)                            # (9, m_img) f32, resident

    vmem_cap = _vmem_capacity_bytes()
    tb = _select_images_per_tile(n, m_img, cin, planes, vmem_cap)
    grid = (n // tb,)
    k1, k2 = 9 * cin, 9 * planes

    # Scoped-VMEM limit from the actual footprint, capped at 3/4 of the
    # generation's physical VMEM (48 MiB on v7x, 96 MiB on v5e/v6e).
    est = (2 * (cin + planes) * tb * m_img * 2          # pipelined bf16 in/out tiles
           + 9 * (cin + planes) * m_img * 2             # bf16 patch matrices
           + 6 * planes * m_img * 4                     # f32 intermediates
           + (k1 + k2) * planes * 2                     # resident weights
           + 9 * m_img * 4 + 2 * planes * 4)            # masks + biases
    vmem_limit = int(min((vmem_cap * 3) // 4,
                         max(32 * 1024 * 1024, 4 * est)))

    kernel = _make_basic_block_kernel(w, tb)
    out_flat = pl.pallas_call(
        kernel,
        out_shape=jax.ShapeDtypeStruct((n, planes, m_img), jnp.bfloat16),
        grid=grid,
        in_specs=[
            pl.BlockSpec((tb, cin, m_img), lambda i: (i, 0, 0)),   # x tile
            pl.BlockSpec((9, m_img), lambda i: (0, 0)),            # tap masks (resident)
            pl.BlockSpec((planes, k1), lambda i: (0, 0)),          # conv1*bn1 weight
            pl.BlockSpec((planes, 1), lambda i: (0, 0)),           # bn1 bias
            pl.BlockSpec((planes, k2), lambda i: (0, 0)),          # conv2*bn2 weight
            pl.BlockSpec((planes, 1), lambda i: (0, 0)),           # bn2 bias
        ],
        out_specs=pl.BlockSpec((tb, planes, m_img), lambda i: (i, 0, 0)),
        compiler_params=pltpu.CompilerParams(
            dimension_semantics=("parallel",),
            vmem_limit_bytes=vmem_limit),
    )(x_flat, masks, w1, b1, w2, b2)

    # (N, Cout, H*W) -> NCHW: contiguous reshape, no HBM relayout.
    return out_flat.reshape(n, planes, h, w)


# ----------------------------------------------------------------------------
# Pure-JAX reference (f32) for the correctness check
# ----------------------------------------------------------------------------
def _conv3x3_ref(x_nchw, w_oihw, stride):
    return lax.conv_general_dilated(
        x_nchw, w_oihw, window_strides=(stride, stride),
        padding=((1, 1), (1, 1)),
        dimension_numbers=("NCHW", "OIHW", "NCHW"))


def basic_block_ref(x_nchw, params, *, in_planes, planes, stride=1):
    assert stride == 1 and in_planes == planes
    x = x_nchw.astype(jnp.float32)
    s1, b1 = _fold_bn(params["bn1_gamma"], params["bn1_beta"],
                      params["bn1_mean"], params["bn1_var"])
    s2, b2 = _fold_bn(params["bn2_gamma"], params["bn2_beta"],
                      params["bn2_mean"], params["bn2_var"])
    out = _conv3x3_ref(x, params["conv1_w"], stride)
    out = jnp.maximum(out * s1[None, :, None, None] + b1[None, :, None, None], 0.0)
    out = _conv3x3_ref(out, params["conv2_w"], 1)
    out = out * s2[None, :, None, None] + b2[None, :, None, None] + x
    return jnp.maximum(out, 0.0)


# ----------------------------------------------------------------------------
# Main
# ----------------------------------------------------------------------------
if __name__ == "__main__":
    in_planes, planes, stride = 4, 4, 1       # identity-shortcut BasicBlock
    N, H, W = 2, 16, 16

    key = jax.random.PRNGKey(0)
    keys = jax.random.split(key, 11)
    params = {
        "conv1_w": 0.1 * jax.random.normal(keys[0], (planes, in_planes, 3, 3), jnp.float32),
        "conv2_w": 0.1 * jax.random.normal(keys[1], (planes, planes, 3, 3), jnp.float32),
        "bn1_gamma": 1.0 + 0.1 * jax.random.normal(keys[2], (planes,), jnp.float32),
        "bn1_beta": 0.05 * jax.random.normal(keys[3], (planes,), jnp.float32),
        "bn1_mean": 0.05 * jax.random.normal(keys[4], (planes,), jnp.float32),
        "bn1_var": 1.0 + 0.1 * jax.random.uniform(keys[5], (planes,), jnp.float32),
        "bn2_gamma": 1.0 + 0.1 * jax.random.normal(keys[6], (planes,), jnp.float32),
        "bn2_beta": 0.05 * jax.random.normal(keys[7], (planes,), jnp.float32),
        "bn2_mean": 0.05 * jax.random.normal(keys[8], (planes,), jnp.float32),
        "bn2_var": 1.0 + 0.1 * jax.random.uniform(keys[9], (planes,), jnp.float32),
    }
    x = jax.random.normal(keys[10], (N, in_planes, H, W), jnp.float32)

    fwd = jax.jit(functools.partial(basic_block_forward,
                                    in_planes=in_planes, planes=planes,
                                    stride=stride, option="A"))
    out = jax.block_until_ready(fwd(x, params))
    assert out.shape == (N, planes, H, W)

    ref = basic_block_ref(x, params, in_planes=in_planes, planes=planes,
                          stride=stride)
    # bf16 activation I/O + bf16 MXU operands (with f32 accumulation and f32
    # epilogue) keep the max error well under this tolerance for O(1) values.
    out_f32 = out.astype(jnp.float32)
    err = jnp.max(jnp.abs(out_f32 - ref))
    assert jnp.allclose(out_f32, ref, atol=5e-2, rtol=5e-2), f"max err {err}"

    print("KERNEL_OK")
</pallas_src>

<mosaic_0001>
module attributes {stable_mosaic.version = 11 : i64} {
  func.func @kernel(%arg0: i32, %arg1: memref<1x4x256xbf16, #tpu.memory_space<vmem>>, %arg2: memref<9x256xf32, #tpu.memory_space<vmem>>, %arg3: memref<4x36xbf16, #tpu.memory_space<vmem>>, %arg4: memref<4x1xf32, #tpu.memory_space<vmem>>, %arg5: memref<4x36xbf16, #tpu.memory_space<vmem>>, %arg6: memref<4x1xf32, #tpu.memory_space<vmem>>, %arg7: memref<1x4x256xbf16, #tpu.memory_space<vmem>>) attributes {dimension_semantics = [#tpu.dimension_semantics<parallel>], iteration_bounds = array<i64: 2>, scalar_prefetch = 0 : i64, scratch_operands = 0 : i64, tpu.core_type = #tpu.core_type<tc>, window_params = [{transform_indices = @transform_0, window_bounds = array<i64: 1, 4, 256>}, {pipeline_mode = #tpu.pipeline_mode<synchronous>, transform_indices = @transform_1, window_bounds = array<i64: 9, 256>}, {pipeline_mode = #tpu.pipeline_mode<synchronous>, transform_indices = @transform_2, window_bounds = array<i64: 4, 36>}, {pipeline_mode = #tpu.pipeline_mode<synchronous>, transform_indices = @transform_3, window_bounds = array<i64: 4, 1>}, {pipeline_mode = #tpu.pipeline_mode<synchronous>, transform_indices = @transform_4, window_bounds = array<i64: 4, 36>}, {pipeline_mode = #tpu.pipeline_mode<synchronous>, transform_indices = @transform_5, window_bounds = array<i64: 4, 1>}, {transform_indices = @transform_6, window_bounds = array<i64: 1, 4, 256>}]} {
    %c0 = arith.constant 0 : index
    %c0_0 = arith.constant 0 : index
    %0 = vector.load %arg3[%c0, %c0_0] : memref<4x36xbf16, #tpu.memory_space<vmem>>, vector<4x36xbf16>
    %c0_1 = arith.constant 0 : index
    %c0_2 = arith.constant 0 : index
    %1 = vector.load %arg5[%c0_1, %c0_2] : memref<4x36xbf16, #tpu.memory_space<vmem>>, vector<4x36xbf16>
    %c0_3 = arith.constant 0 : index
    %c0_4 = arith.constant 0 : index
    %2 = vector.load %arg4[%c0_3, %c0_4] : memref<4x1xf32, #tpu.memory_space<vmem>>, vector<4x1xf32>
    %c0_5 = arith.constant 0 : index
    %c0_6 = arith.constant 0 : index
    %3 = vector.load %arg6[%c0_5, %c0_6] : memref<4x1xf32, #tpu.memory_space<vmem>>, vector<4x1xf32>
    %c0_7 = arith.constant 0 : index
    %c0_8 = arith.constant 0 : index
    %4 = vector.load %arg2[%c0_7, %c0_8] : memref<9x256xf32, #tpu.memory_space<vmem>>, vector<1x256xf32>
    %cst = arith.constant 0.000000e+00 : f32
    %5 = vector.broadcast %cst : f32 to vector<1x256xf32>
    %6 = arith.cmpf one, %4, %5 : vector<1x256xf32>
    %c1 = arith.constant 1 : index
    %c0_9 = arith.constant 0 : index
    %7 = vector.load %arg2[%c1, %c0_9] : memref<9x256xf32, #tpu.memory_space<vmem>>, vector<1x256xf32>
    %cst_10 = arith.constant 0.000000e+00 : f32
    %8 = vector.broadcast %cst_10 : f32 to vector<1x256xf32>
    %9 = arith.cmpf one, %7, %8 : vector<1x256xf32>
    %c2 = arith.constant 2 : index
    %c0_11 = arith.constant 0 : index
    %10 = vector.load %arg2[%c2, %c0_11] : memref<9x256xf32, #tpu.memory_space<vmem>>, vector<1x256xf32>
    %cst_12 = arith.constant 0.000000e+00 : f32
    %11 = vector.broadcast %cst_12 : f32 to vector<1x256xf32>
    %12 = arith.cmpf one, %10, %11 : vector<1x256xf32>
    %c3 = arith.constant 3 : index
    %c0_13 = arith.constant 0 : index
    %13 = vector.load %arg2[%c3, %c0_13] : memref<9x256xf32, #tpu.memory_space<vmem>>, vector<1x256xf32>
    %cst_14 = arith.constant 0.000000e+00 : f32
    %14 = vector.broadcast %cst_14 : f32 to vector<1x256xf32>
    %15 = arith.cmpf one, %13, %14 : vector<1x256xf32>
    %c5 = arith.constant 5 : index
    %c0_15 = arith.constant 0 : index
    %16 = vector.load %arg2[%c5, %c0_15] : memref<9x256xf32, #tpu.memory_space<vmem>>, vector<1x256xf32>
    %cst_16 = arith.constant 0.000000e+00 : f32
    %17 = vector.broadcast %cst_16 : f32 to vector<1x256xf32>
    %18 = arith.cmpf one, %16, %17 : vector<1x256xf32>
    %c6 = arith.constant 6 : index
    %c0_17 = arith.constant 0 : index
    %19 = vector.load %arg2[%c6, %c0_17] : memref<9x256xf32, #tpu.memory_space<vmem>>, vector<1x256xf32>
    %cst_18 = arith.constant 0.000000e+00 : f32
    %20 = vector.broadcast %cst_18 : f32 to vector<1x256xf32>
    %21 = arith.cmpf one, %19, %20 : vector<1x256xf32>
    %c7 = arith.constant 7 : index
    %c0_19 = arith.constant 0 : index
    %22 = vector.load %arg2[%c7, %c0_19] : memref<9x256xf32, #tpu.memory_space<vmem>>, vector<1x256xf32>
    %cst_20 = arith.constant 0.000000e+00 : f32
    %23 = vector.broadcast %cst_20 : f32 to vector<1x256xf32>
    %24 = arith.cmpf one, %22, %23 : vector<1x256xf32>
    %c8 = arith.constant 8 : index
    %c0_21 = arith.constant 0 : index
    %25 = vector.load %arg2[%c8, %c0_21] : memref<9x256xf32, #tpu.memory_space<vmem>>, vector<1x256xf32>
    %cst_22 = arith.constant 0.000000e+00 : f32
    %26 = vector.broadcast %cst_22 : f32 to vector<1x256xf32>
    %27 = arith.cmpf one, %25, %26 : vector<1x256xf32>
    %c0_23 = arith.constant 0 : index
    %c0_24 = arith.constant 0 : index
    %c0_25 = arith.constant 0 : index
    %28 = vector.load %arg1[%c0_23, %c0_24, %c0_25] : memref<1x4x256xbf16, #tpu.memory_space<vmem>>, vector<1x4x256xbf16>
    %29 = vector.shape_cast %28 : vector<1x4x256xbf16> to vector<4x256xbf16>
    %30 = vector.extract_strided_slice %29 {offsets = [0, 239], sizes = [4, 17], strides = [1, 1]} : vector<4x256xbf16> to vector<4x17xbf16>
    %31 = vector.extract_strided_slice %29 {offsets = [0, 0], sizes = [4, 239], strides = [1, 1]} : vector<4x256xbf16> to vector<4x239xbf16>
    %32 = tpu.concatenate %30, %31 in 1 : vector<4x17xbf16>, vector<4x239xbf16> -> vector<4x256xbf16>
    %cst_26 = arith.constant 0.000000e+00 : bf16
    %33 = vector.broadcast %cst_26 : bf16 to vector<4x256xbf16>
    %34 = vector.shape_cast %6 : vector<1x256xi1> to vector<1x256xi1>
    %35 = vector.broadcast %34 : vector<1x256xi1> to vector<4x256xi1>
    %36 = arith.select %35, %32, %33 : vector<4x256xi1>, vector<4x256xbf16>
    %37 = vector.extract_strided_slice %29 {offsets = [0, 240], sizes = [4, 16], strides = [1, 1]} : vector<4x256xbf16> to vector<4x16xbf16>
    %38 = vector.extract_strided_slice %29 {offsets = [0, 0], sizes = [4, 240], strides = [1, 1]} : vector<4x256xbf16> to vector<4x240xbf16>
    %39 = tpu.concatenate %37, %38 in 1 : vector<4x16xbf16>, vector<4x240xbf16> -> vector<4x256xbf16>
    %cst_27 = arith.constant 0.000000e+00 : bf16
    %40 = vector.broadcast %cst_27 : bf16 to vector<4x256xbf16>
    %41 = vector.shape_cast %9 : vector<1x256xi1> to vector<1x256xi1>
    %42 = vector.broadcast %41 : vector<1x256xi1> to vector<4x256xi1>
    %43 = arith.select %42, %39, %40 : vector<4x256xi1>, vector<4x256xbf16>
    %44 = vector.extract_strided_slice %29 {offsets = [0, 241], sizes = [4, 15], strides = [1, 1]} : vector<4x256xbf16> to vector<4x15xbf16>
    %45 = vector.extract_strided_slice %29 {offsets = [0, 0], sizes = [4, 241], strides = [1, 1]} : vector<4x256xbf16> to vector<4x241xbf16>
    %46 = tpu.concatenate %44, %45 in 1 : vector<4x15xbf16>, vector<4x241xbf16> -> vector<4x256xbf16>
    %cst_28 = arith.constant 0.000000e+00 : bf16
    %47 = vector.broadcast %cst_28 : bf16 to vector<4x256xbf16>
    %48 = vector.shape_cast %12 : vector<1x256xi1> to vector<1x256xi1>
    %49 = vector.broadcast %48 : vector<1x256xi1> to vector<4x256xi1>
    %50 = arith.select %49, %46, %47 : vector<4x256xi1>, vector<4x256xbf16>
    %51 = vector.extract_strided_slice %29 {offsets = [0, 255], sizes = [4, 1], strides = [1, 1]} : vector<4x256xbf16> to vector<4x1xbf16>
    %52 = vector.extract_strided_slice %29 {offsets = [0, 0], sizes = [4, 255], strides = [1, 1]} : vector<4x256xbf16> to vector<4x255xbf16>
    %53 = tpu.concatenate %51, %52 in 1 : vector<4x1xbf16>, vector<4x255xbf16> -> vector<4x256xbf16>
    %cst_29 = arith.constant 0.000000e+00 : bf16
    %54 = vector.broadcast %cst_29 : bf16 to vector<4x256xbf16>
    %55 = vector.shape_cast %15 : vector<1x256xi1> to vector<1x256xi1>
    %56 = vector.broadcast %55 : vector<1x256xi1> to vector<4x256xi1>
    %57 = arith.select %56, %53, %54 : vector<4x256xi1>, vector<4x256xbf16>
    %58 = vector.extract_strided_slice %29 {offsets = [0, 1], sizes = [4, 255], strides = [1, 1]} : vector<4x256xbf16> to vector<4x255xbf16>
    %59 = vector.extract_strided_slice %29 {offsets = [0, 0], sizes = [4, 1], strides = [1, 1]} : vector<4x256xbf16> to vector<4x1xbf16>
    %60 = tpu.concatenate %58, %59 in 1 : vector<4x255xbf16>, vector<4x1xbf16> -> vector<4x256xbf16>
    %cst_30 = arith.constant 0.000000e+00 : bf16
    %61 = vector.broadcast %cst_30 : bf16 to vector<4x256xbf16>
    %62 = vector.shape_cast %18 : vector<1x256xi1> to vector<1x256xi1>
    %63 = vector.broadcast %62 : vector<1x256xi1> to vector<4x256xi1>
    %64 = arith.select %63, %60, %61 : vector<4x256xi1>, vector<4x256xbf16>
    %65 = vector.extract_strided_slice %29 {offsets = [0, 15], sizes = [4, 241], strides = [1, 1]} : vector<4x256xbf16> to vector<4x241xbf16>
    %66 = vector.extract_strided_slice %29 {offsets = [0, 0], sizes = [4, 15], strides = [1, 1]} : vector<4x256xbf16> to vector<4x15xbf16>
    %67 = tpu.concatenate %65, %66 in 1 : vector<4x241xbf16>, vector<4x15xbf16> -> vector<4x256xbf16>
    %cst_31 = arith.constant 0.000000e+00 : bf16
    %68 = vector.broadcast %cst_31 : bf16 to vector<4x256xbf16>
    %69 = vector.shape_cast %21 : vector<1x256xi1> to vector<1x256xi1>
    %70 = vector.broadcast %69 : vector<1x256xi1> to vector<4x256xi1>
    %71 = arith.select %70, %67, %68 : vector<4x256xi1>, vector<4x256xbf16>
    %72 = vector.extract_strided_slice %29 {offsets = [0, 16], sizes = [4, 240], strides = [1, 1]} : vector<4x256xbf16> to vector<4x240xbf16>
    %73 = vector.extract_strided_slice %29 {offsets = [0, 0], sizes = [4, 16], strides = [1, 1]} : vector<4x256xbf16> to vector<4x16xbf16>
    %74 = tpu.concatenate %72, %73 in 1 : vector<4x240xbf16>, vector<4x16xbf16> -> vector<4x256xbf16>
    %cst_32 = arith.constant 0.000000e+00 : bf16
    %75 = vector.broadcast %cst_32 : bf16 to vector<4x256xbf16>
    %76 = vector.shape_cast %24 : vector<1x256xi1> to vector<1x256xi1>
    %77 = vector.broadcast %76 : vector<1x256xi1> to vector<4x256xi1>
    %78 = arith.select %77, %74, %75 : vector<4x256xi1>, vector<4x256xbf16>
    %79 = vector.extract_strided_slice %29 {offsets = [0, 17], sizes = [4, 239], strides = [1, 1]} : vector<4x256xbf16> to vector<4x239xbf16>
    %80 = vector.extract_strided_slice %29 {offsets = [0, 0], sizes = [4, 17], strides = [1, 1]} : vector<4x256xbf16> to vector<4x17xbf16>
    %81 = tpu.concatenate %79, %80 in 1 : vector<4x239xbf16>, vector<4x17xbf16> -> vector<4x256xbf16>
    %cst_33 = arith.constant 0.000000e+00 : bf16
    %82 = vector.broadcast %cst_33 : bf16 to vector<4x256xbf16>
    %83 = vector.shape_cast %27 : vector<1x256xi1> to vector<1x256xi1>
    %84 = vector.broadcast %83 : vector<1x256xi1> to vector<4x256xi1>
    %85 = arith.select %84, %81, %82 : vector<4x256xi1>, vector<4x256xbf16>
    %86 = tpu.concatenate %36, %43, %50, %57, %29, %64, %71, %78, %85 in 0 : vector<4x256xbf16>, vector<4x256xbf16>, vector<4x256xbf16>, vector<4x256xbf16>, vector<4x256xbf16>, vector<4x256xbf16>, vector<4x256xbf16>, vector<4x256xbf16>, vector<4x256xbf16> -> vector<36x256xbf16>
    %cst_34 = arith.constant dense<0.000000e+00> : vector<4x256xf32>
    %87 = tpu.matmul %0, %86, %cst_34 {dimension_numbers = #tpu.dot_dimension_numbers<[1], [0], [0], [1], [0, 0, 1, 1], [], []>} : vector<4x36xbf16>, vector<36x256xbf16>, vector<4x256xf32> -> vector<4x256xf32>
    %88 = vector.broadcast %2 : vector<4x1xf32> to vector<4x256xf32>
    %89 = arith.addf %87, %88 : vector<4x256xf32>
    %cst_35 = arith.constant 0.000000e+00 : f32
    %90 = vector.broadcast %cst_35 : f32 to vector<4x256xf32>
    %91 = arith.maximumf %89, %90 : vector<4x256xf32>
    %92 = arith.truncf %91 : vector<4x256xf32> to vector<4x256xbf16>
    %93 = vector.extract_strided_slice %92 {offsets = [0, 239], sizes = [4, 17], strides = [1, 1]} : vector<4x256xbf16> to vector<4x17xbf16>
    %94 = vector.extract_strided_slice %92 {offsets = [0, 0], sizes = [4, 239], strides = [1, 1]} : vector<4x256xbf16> to vector<4x239xbf16>
    %95 = tpu.concatenate %93, %94 in 1 : vector<4x17xbf16>, vector<4x239xbf16> -> vector<4x256xbf16>
    %cst_36 = arith.constant 0.000000e+00 : bf16
    %96 = vector.broadcast %cst_36 : bf16 to vector<4x256xbf16>
    %97 = vector.shape_cast %6 : vector<1x256xi1> to vector<1x256xi1>
    %98 = vector.broadcast %97 : vector<1x256xi1> to vector<4x256xi1>
    %99 = arith.select %98, %95, %96 : vector<4x256xi1>, vector<4x256xbf16>
    %100 = vector.extract_strided_slice %92 {offsets = [0, 240], sizes = [4, 16], strides = [1, 1]} : vector<4x256xbf16> to vector<4x16xbf16>
    %101 = vector.extract_strided_slice %92 {offsets = [0, 0], sizes = [4, 240], strides = [1, 1]} : vector<4x256xbf16> to vector<4x240xbf16>
    %102 = tpu.concatenate %100, %101 in 1 : vector<4x16xbf16>, vector<4x240xbf16> -> vector<4x256xbf16>
    %cst_37 = arith.constant 0.000000e+00 : bf16
    %103 = vector.broadcast %cst_37 : bf16 to vector<4x256xbf16>
    %104 = vector.shape_cast %9 : vector<1x256xi1> to vector<1x256xi1>
    %105 = vector.broadcast %104 : vector<1x256xi1> to vector<4x256xi1>
    %106 = arith.select %105, %102, %103 : vector<4x256xi1>, vector<4x256xbf16>
    %107 = vector.extract_strided_slice %92 {offsets = [0, 241], sizes = [4, 15], strides = [1, 1]} : vector<4x256xbf16> to vector<4x15xbf16>
    %108 = vector.extract_strided_slice %92 {offsets = [0, 0], sizes = [4, 241], strides = [1, 1]} : vector<4x256xbf16> to vector<4x241xbf16>
    %109 = tpu.concatenate %107, %108 in 1 : vector<4x15xbf16>, vector<4x241xbf16> -> vector<4x256xbf16>
    %cst_38 = arith.constant 0.000000e+00 : bf16
    %110 = vector.broadcast %cst_38 : bf16 to vector<4x256xbf16>
    %111 = vector.shape_cast %12 : vector<1x256xi1> to vector<1x256xi1>
    %112 = vector.broadcast %111 : vector<1x256xi1> to vector<4x256xi1>
    %113 = arith.select %112, %109, %110 : vector<4x256xi1>, vector<4x256xbf16>
    %114 = vector.extract_strided_slice %92 {offsets = [0, 255], sizes = [4, 1], strides = [1, 1]} : vector<4x256xbf16> to vector<4x1xbf16>
    %115 = vector.extract_strided_slice %92 {offsets = [0, 0], sizes = [4, 255], strides = [1, 1]} : vector<4x256xbf16> to vector<4x255xbf16>
    %116 = tpu.concatenate %114, %115 in 1 : vector<4x1xbf16>, vector<4x255xbf16> -> vector<4x256xbf16>
    %cst_39 = arith.constant 0.000000e+00 : bf16
    %117 = vector.broadcast %cst_39 : bf16 to vector<4x256xbf16>
    %118 = vector.shape_cast %15 : vector<1x256xi1> to vector<1x256xi1>
    %119 = vector.broadcast %118 : vector<1x256xi1> to vector<4x256xi1>
    %120 = arith.select %119, %116, %117 : vector<4x256xi1>, vector<4x256xbf16>
    %121 = vector.extract_strided_slice %92 {offsets = [0, 1], sizes = [4, 255], strides = [1, 1]} : vector<4x256xbf16> to vector<4x255xbf16>
    %122 = vector.extract_strided_slice %92 {offsets = [0, 0], sizes = [4, 1], strides = [1, 1]} : vector<4x256xbf16> to vector<4x1xbf16>
    %123 = tpu.concatenate %121, %122 in 1 : vector<4x255xbf16>, vector<4x1xbf16> -> vector<4x256xbf16>
    %cst_40 = arith.constant 0.000000e+00 : bf16
    %124 = vector.broadcast %cst_40 : bf16 to vector<4x256xbf16>
    %125 = vector.shape_cast %18 : vector<1x256xi1> to vector<1x256xi1>
    %126 = vector.broadcast %125 : vector<1x256xi1> to vector<4x256xi1>
    %127 = arith.select %126, %123, %124 : vector<4x256xi1>, vector<4x256xbf16>
    %128 = vector.extract_strided_slice %92 {offsets = [0, 15], sizes = [4, 241], strides = [1, 1]} : vector<4x256xbf16> to vector<4x241xbf16>
    %129 = vector.extract_strided_slice %92 {offsets = [0, 0], sizes = [4, 15], strides = [1, 1]} : vector<4x256xbf16> to vector<4x15xbf16>
    %130 = tpu.concatenate %128, %129 in 1 : vector<4x241xbf16>, vector<4x15xbf16> -> vector<4x256xbf16>
    %cst_41 = arith.constant 0.000000e+00 : bf16
    %131 = vector.broadcast %cst_41 : bf16 to vector<4x256xbf16>
    %132 = vector.shape_cast %21 : vector<1x256xi1> to vector<1x256xi1>
    %133 = vector.broadcast %132 : vector<1x256xi1> to vector<4x256xi1>
    %134 = arith.select %133, %130, %131 : vector<4x256xi1>, vector<4x256xbf16>
    %135 = vector.extract_strided_slice %92 {offsets = [0, 16], sizes = [4, 240], strides = [1, 1]} : vector<4x256xbf16> to vector<4x240xbf16>
    %136 = vector.extract_strided_slice %92 {offsets = [0, 0], sizes = [4, 16], strides = [1, 1]} : vector<4x256xbf16> to vector<4x16xbf16>
    %137 = tpu.concatenate %135, %136 in 1 : vector<4x240xbf16>, vector<4x16xbf16> -> vector<4x256xbf16>
    %cst_42 = arith.constant 0.000000e+00 : bf16
    %138 = vector.broadcast %cst_42 : bf16 to vector<4x256xbf16>
    %139 = vector.shape_cast %24 : vector<1x256xi1> to vector<1x256xi1>
    %140 = vector.broadcast %139 : vector<1x256xi1> to vector<4x256xi1>
    %141 = arith.select %140, %137, %138 : vector<4x256xi1>, vector<4x256xbf16>
    %142 = vector.extract_strided_slice %92 {offsets = [0, 17], sizes = [4, 239], strides = [1, 1]} : vector<4x256xbf16> to vector<4x239xbf16>
    %143 = vector.extract_strided_slice %92 {offsets = [0, 0], sizes = [4, 17], strides = [1, 1]} : vector<4x256xbf16> to vector<4x17xbf16>
    %144 = tpu.concatenate %142, %143 in 1 : vector<4x239xbf16>, vector<4x17xbf16> -> vector<4x256xbf16>
    %cst_43 = arith.constant 0.000000e+00 : bf16
    %145 = vector.broadcast %cst_43 : bf16 to vector<4x256xbf16>
    %146 = vector.shape_cast %27 : vector<1x256xi1> to vector<1x256xi1>
    %147 = vector.broadcast %146 : vector<1x256xi1> to vector<4x256xi1>
    %148 = arith.select %147, %144, %145 : vector<4x256xi1>, vector<4x256xbf16>
    %149 = tpu.concatenate %99, %106, %113, %120, %92, %127, %134, %141, %148 in 0 : vector<4x256xbf16>, vector<4x256xbf16>, vector<4x256xbf16>, vector<4x256xbf16>, vector<4x256xbf16>, vector<4x256xbf16>, vector<4x256xbf16>, vector<4x256xbf16>, vector<4x256xbf16> -> vector<36x256xbf16>
    %cst_44 = arith.constant dense<0.000000e+00> : vector<4x256xf32>
    %150 = tpu.matmul %1, %149, %cst_44 {dimension_numbers = #tpu.dot_dimension_numbers<[1], [0], [0], [1], [0, 0, 1, 1], [], []>} : vector<4x36xbf16>, vector<36x256xbf16>, vector<4x256xf32> -> vector<4x256xf32>
    %151 = vector.broadcast %3 : vector<4x1xf32> to vector<4x256xf32>
    %152 = arith.addf %150, %151 : vector<4x256xf32>
    %153 = arith.extf %29 : vector<4x256xbf16> to vector<4x256xf32>
    %154 = arith.addf %152, %153 : vector<4x256xf32>
    %cst_45 = arith.constant 0.000000e+00 : f32
    %155 = vector.broadcast %cst_45 : f32 to vector<4x256xf32>
    %156 = arith.maximumf %154, %155 : vector<4x256xf32>
    %157 = arith.truncf %156 : vector<4x256xf32> to vector<4x256xbf16>
    %c0_46 = arith.constant 0 : index
    %c0_47 = arith.constant 0 : index
    %c0_48 = arith.constant 0 : index
    %158 = vector.load %arg7[%c0_46, %c0_47, %c0_48] : memref<1x4x256xbf16, #tpu.memory_space<vmem>>, vector<1x4x256xbf16>
    %159 = vector.shape_cast %158 : vector<1x4x256xbf16> to vector<4x256xbf16>
    %160 = vector.shape_cast %157 : vector<4x256xbf16> to vector<1x4x256xbf16>
    tpu.vector_store %arg7[%c0_46, %c0_47, %c0_48], %160 {strides = array<i32>} : memref<1x4x256xbf16, #tpu.memory_space<vmem>>, vector<1x4x256xbf16>,
    return
  }
  func.func @transform_0(%arg0: i32) -> (i32, i32, i32) {
    %c0_i32 = arith.constant 0 : i32
    %c0_i32_0 = arith.constant 0 : i32
    %c0_i32_1 = arith.constant 0 : i32
    return %arg0, %c0_i32, %c0_i32_0 : i32, i32, i32
  }
  func.func @transform_1(%arg0: i32) -> (i32, i32) {
    %c0_i32 = arith.constant 0 : i32
    %c0_i32_0 = arith.constant 0 : i32
    %c0_i32_1 = arith.constant 0 : i32
    return %c0_i32, %c0_i32_0 : i32, i32
  }
  func.func @transform_2(%arg0: i32) -> (i32, i32) {
    %c0_i32 = arith.constant 0 : i32
    %c0_i32_0 = arith.constant 0 : i32
    %c0_i32_1 = arith.constant 0 : i32
    return %c0_i32, %c0_i32_0 : i32, i32
  }
  func.func @transform_3(%arg0: i32) -> (i32, i32) {
    %c0_i32 = arith.constant 0 : i32
    %c0_i32_0 = arith.constant 0 : i32
    %c0_i32_1 = arith.constant 0 : i32
    return %c0_i32, %c0_i32_0 : i32, i32
  }
  func.func @transform_4(%arg0: i32) -> (i32, i32) {
    %c0_i32 = arith.constant 0 : i32
    %c0_i32_0 = arith.constant 0 : i32
    %c0_i32_1 = arith.constant 0 : i32
    return %c0_i32, %c0_i32_0 : i32, i32
  }
  func.func @transform_5(%arg0: i32) -> (i32, i32) {
    %c0_i32 = arith.constant 0 : i32
    %c0_i32_0 = arith.constant 0 : i32
    %c0_i32_1 = arith.constant 0 : i32
    return %c0_i32, %c0_i32_0 : i32, i32
  }
  func.func @transform_6(%arg0: i32) -> (i32, i32, i32) {
    %c0_i32 = arith.constant 0 : i32
    %c0_i32_0 = arith.constant 0 : i32
    %c0_i32_1 = arith.constant 0 : i32
    return %arg0, %c0_i32, %c0_i32_0 : i32, i32, i32
  }
}

</mosaic_0001>

<llo_original>
// kernel: basic_block_forward.1
$region0: #{basic_block_forward.1}
  #allocation0 [shape = 'u32[]', space=smem, size = 0x4, offset = 0x4, fixed_abs, tag = 'smem constant byte address 0x4 - core index']
  #allocation1 [shape = 'u32[144,128]{1,0:T(1,128)}', space=vmem, size = 0x12000, scoped, tag = 'internal scratch']
  %s0 = inlined_call_operand.vmem [shape: bf16[2,4,256], index: 0, kind: input, shape index: {}]
  %s1 = inlined_call_operand.vmem [shape: f32[9,256], index: 1, kind: input, shape index: {}]
  %s2 = inlined_call_operand.vmem [shape: bf16[4,36], index: 2, kind: input, shape index: {}]
  %s3 = inlined_call_operand.vmem [shape: f32[4,1], index: 3, kind: input, shape index: {}]
  %s4 = inlined_call_operand.vmem [shape: bf16[4,36], index: 4, kind: input, shape index: {}]
  %s5 = inlined_call_operand.vmem [shape: f32[4,1], index: 5, kind: input, shape index: {}]
  %s6 = inlined_call_operand.vmem [shape: bf16[2,4,256], index: 6, kind: output, shape index: {}]
  %s7 = sld [smem:[#allocation0]]
  $region57: #{basic_block_forward.1} parent=0
    _
  %s9 = ssub.s32 1, %s7
  %s10 = scalar_select 0, %s9, %s7
  loop: start=0, step=1, limit=4
  $region2: #{basic_block_forward.1} parent=0 // loop_pre_header
    _
  $region3: #{basic_block_forward.1} parent=0 // loop_header
    %s12 = sphi 0, %s16
    %p13 = scmp.ge.s32.totalorder %s12, 4
    %s22 = sphi 0, %s24
    %s25 = sphi 0, %s22
    %s26 = sphi 0, %s25
    %s42 = sphi 0, %s26
    %s46 = sphi 0, %s46
    %s48 = sphi 0, %s46
    %s49 = sphi 0, %s48
    %s63 = sphi 0, %s49
    %s67 = sphi 0, %s67
    %s69 = sphi 0, %s67
    %s70 = sphi 0, %s69
    %s84 = sphi 0, %s70
    %s88 = sphi 0, %s88
    %s90 = sphi 0, %s88
    %s91 = sphi 0, %s90
    %s105 = sphi 0, %s91
    %s109 = sphi 0, %s109
    %s111 = sphi 0, %s109
    %s112 = sphi 0, %s111
    %s126 = sphi 0, %s112
    %s130 = sphi 0, %s130
    %s132 = sphi 0, %s130
    %s133 = sphi 0, %s132
    %s147 = sphi 0, %s133
    %s153 = sphi 0, %s155
    %s156 = sphi 0, %s153
    %s157 = sphi 0, %s156
    %s173 = sphi 0, %s157
  $region4: #{basic_block_forward.1} parent=0 // loop_header_branch
    %15 = sbr.rel (%p13) target = $region8
  $region5: #{basic_block_forward.1} parent=0 // loop_body
    %s17 = ssub.s32 %s12, 1
    %s18 = ssub.s32 %s12, 2
    %s19 = sadd.s32 %s12, 1
    %s20 = ssub.s32 %s12, %s19
    %p21 = scmp.eq.s32.totalorder %s20, 0
    %s23 = sadd.s32 %s22, 1
    %s24 = scalar_select %p21, %s22, %s23
    %p27 = pneg %p21
    %p28 = scmp.eq.s32.totalorder %s12, 1
    %p29 = por %p27, %p28
    %p30 = scmp.ne.s32.totalorder %s22, %s25
    %p31 = scmp.eq.s32.totalorder %s12, 0
    %p32 = por %p30, %p31
    %p33 = scmp.ne.s32.totalorder %s22, %s25
    %p34 = scmp.eq.s32.totalorder %s17, 1
    %p35 = por %p33, %p34
    %p36 = scmp.ne.s32.totalorder %s25, %s26
    %p37 = scmp.eq.s32.totalorder %s17, 0
    %p38 = por %p36, %p37
    %p39 = scmp.ne.s32.totalorder %s25, %s26
    %p40 = scmp.eq.s32.totalorder %s18, 1
    %p41 = por %p39, %p40
    %p43 = scmp.ne.s32.totalorder %s26, %s42
    %p44 = scmp.eq.s32.totalorder %s18, 0
    %p45 = por %p43, %p44
    %s47 = sadd.s32 %s46, 1
    %p50 = scmp.eq.s32.totalorder %s12, 1
    %p51 = scmp.ne.s32.totalorder %s46, %s48
    %p52 = scmp.eq.s32.totalorder %s12, 0
    %p53 = por %p51, %p52
    %p54 = scmp.ne.s32.totalorder %s46, %s48
    %p55 = scmp.eq.s32.totalorder %s17, 1
    %p56 = por %p54, %p55
    %p57 = scmp.ne.s32.totalorder %s48, %s49
    %p58 = scmp.eq.s32.totalorder %s17, 0
    %p59 = por %p57, %p58
    %p60 = scmp.ne.s32.totalorder %s48, %s49
    %p61 = scmp.eq.s32.totalorder %s18, 1
    %p62 = por %p60, %p61
    %p64 = scmp.ne.s32.totalorder %s49, %s63
    %p65 = scmp.eq.s32.totalorder %s18, 0
    %p66 = por %p64, %p65
    %s68 = sadd.s32 %s67, 1
    %p71 = scmp.eq.s32.totalorder %s12, 1
    %p72 = scmp.ne.s32.totalorder %s67, %s69
    %p73 = scmp.eq.s32.totalorder %s12, 0
    %p74 = por %p72, %p73
    %p75 = scmp.ne.s32.totalorder %s67, %s69
    %p76 = scmp.eq.s32.totalorder %s17, 1
    %p77 = por %p75, %p76
    %p78 = scmp.ne.s32.totalorder %s69, %s70
    %p79 = scmp.eq.s32.totalorder %s17, 0
    %p80 = por %p78, %p79
    %p81 = scmp.ne.s32.totalorder %s69, %s70
    %p82 = scmp.eq.s32.totalorder %s18, 1
    %p83 = por %p81, %p82
    %p85 = scmp.ne.s32.totalorder %s70, %s84
    %p86 = scmp.eq.s32.totalorder %s18, 0
    %p87 = por %p85, %p86
    %s89 = sadd.s32 %s88, 1
    %p92 = scmp.eq.s32.totalorder %s12, 1
    %p93 = scmp.ne.s32.totalorder %s88, %s90
    %p94 = scmp.eq.s32.totalorder %s12, 0
    %p95 = por %p93, %p94
    %p96 = scmp.ne.s32.totalorder %s88, %s90
    %p97 = scmp.eq.s32.totalorder %s17, 1
    %p98 = por %p96, %p97
    %p99 = scmp.ne.s32.totalorder %s90, %s91
    %p100 = scmp.eq.s32.totalorder %s17, 0
    %p101 = por %p99, %p100
    %p102 = scmp.ne.s32.totalorder %s90, %s91
    %p103 = scmp.eq.s32.totalorder %s18, 1
    %p104 = por %p102, %p103
    %p106 = scmp.ne.s32.totalorder %s91, %s105
    %p107 = scmp.eq.s32.totalorder %s18, 0
    %p108 = por %p106, %p107
    %s110 = sadd.s32 %s109, 1
    %p113 = scmp.eq.s32.totalorder %s12, 1
    %p114 = scmp.ne.s32.totalorder %s109, %s111
    %p115 = scmp.eq.s32.totalorder %s12, 0
    %p116 = por %p114, %p115
    %p117 = scmp.ne.s32.totalorder %s109, %s111
    %p118 = scmp.eq.s32.totalorder %s17, 1
    %p119 = por %p117, %p118
    %p120 = scmp.ne.s32.totalorder %s111, %s112
    %p121 = scmp.eq.s32.totalorder %s17, 0
    %p122 = por %p120, %p121
    %p123 = scmp.ne.s32.totalorder %s111, %s112
    %p124 = scmp.eq.s32.totalorder %s18, 1
    %p125 = por %p123, %p124
    %p127 = scmp.ne.s32.totalorder %s112, %s126
    %p128 = scmp.eq.s32.totalorder %s18, 0
    %p129 = por %p127, %p128
    %s131 = sadd.s32 %s130, 1
    %p134 = scmp.eq.s32.totalorder %s12, 1
    %p135 = scmp.ne.s32.totalorder %s130, %s132
    %p136 = scmp.eq.s32.totalorder %s12, 0
    %p137 = por %p135, %p136
    %p138 = scmp.ne.s32.totalorder %s130, %s132
    %p139 = scmp.eq.s32.totalorder %s17, 1
    %p140 = por %p138, %p139
    %p141 = scmp.ne.s32.totalorder %s132, %s133
    %p142 = scmp.eq.s32.totalorder %s17, 0
    %p143 = por %p141, %p142
    %p144 = scmp.ne.s32.totalorder %s132, %s133
    %p145 = scmp.eq.s32.totalorder %s18, 1
    %p146 = por %p144, %p145
    %p148 = scmp.ne.s32.totalorder %s133, %s147
    %p149 = scmp.eq.s32.totalorder %s18, 0
    %p150 = por %p148, %p149
    %s151 = ssub.s32 %s12, %s19
    %p152 = scmp.eq.s32.totalorder %s151, 0
    %s154 = sadd.s32 %s153, 1
    %s155 = scalar_select %p152, %s153, %s154
    %p158 = pneg %p152
    %p159 = scmp.eq.s32.totalorder %s12, 1
    %p160 = por %p158, %p159
    %p161 = scmp.ne.s32.totalorder %s153, %s156
    %p162 = scmp.eq.s32.totalorder %s12, 0
    %p163 = por %p161, %p162
    %p164 = scmp.ne.s32.totalorder %s153, %s156
    %p165 = scmp.eq.s32.totalorder %s17, 1
    %p166 = por %p164, %p165
    %p167 = scmp.ne.s32.totalorder %s156, %s157
    %p168 = scmp.eq.s32.totalorder %s17, 0
    %p169 = por %p167, %p168
    %p170 = scmp.ne.s32.totalorder %s156, %s157
    %p171 = scmp.eq.s32.totalorder %s18, 1
    %p172 = por %p170, %p171
    %p174 = scmp.ne.s32.totalorder %s157, %s173
    %p175 = scmp.eq.s32.totalorder %s18, 0
    %p176 = por %p174, %p175
    %p177 = scmp.le.s32.totalorder 1, %s12
    %p178 = scmp.lt.s32.totalorder %s12, 3
    %p179 = pnand %p177, %p178
    %p180 = pneg %p179
    // Predicated region
    $region9: #{basic_block_forward.1} parent=5 // pred_check
      _
    $region10: #{basic_block_forward.1} parent=5 // pred_check_branch
      %182 = sbr.rel (%p179) target = $region12
    $region11: #{basic_block_forward.1} parent=5 // pred_region
      %s183 = ssub.s32 %s12, 1
      // Predicated region
      $region13: #{basic_block_forward.1} parent=11 // pred_check
        %p184 = pneg %p59
      $region14: #{basic_block_forward.1} parent=11 // pred_check_branch
        %186 = sbr.rel (%p184) target = $region16
      $region15: #{basic_block_forward.1} parent=11 // pred_region
        _
      $region16: #{basic_block_forward.1} parent=11 // pred_fallthru
        _
      // Predicated region
      $region17: #{basic_block_forward.1} parent=11 // pred_check
        %p187 = pneg %p80
      $region18: #{basic_block_forward.1} parent=11 // pred_check_branch
        %189 = sbr.rel (%p187) target = $region20
      $region19: #{basic_block_forward.1} parent=11 // pred_region
        _
      $region20: #{basic_block_forward.1} parent=11 // pred_fallthru
        _
      // Predicated region
      $region21: #{basic_block_forward.1} parent=11 // pred_check
        %p190 = pneg %p101
      $region22: #{basic_block_forward.1} parent=11 // pred_check_branch
        %192 = sbr.rel (%p190) target = $region24
      $region23: #{basic_block_forward.1} parent=11 // pred_region
        _
      $region24: #{basic_block_forward.1} parent=11 // pred_fallthru
        _
      // Predicated region
      $region25: #{basic_block_forward.1} parent=11 // pred_check
        %p193 = pneg %p122
      $region26: #{basic_block_forward.1} parent=11 // pred_check_branch
        %195 = sbr.rel (%p193) target = $region28
      $region27: #{basic_block_forward.1} parent=11 // pred_region
        _
      $region28: #{basic_block_forward.1} parent=11 // pred_fallthru
        _
      // Predicated region
      $region29: #{basic_block_forward.1} parent=11 // pred_check
        %p196 = pneg %p143
      $region30: #{basic_block_forward.1} parent=11 // pred_check_branch
        %198 = sbr.rel (%p196) target = $region32
      $region31: #{basic_block_forward.1} parent=11 // pred_region
        _
      $region32: #{basic_block_forward.1} parent=11 // pred_fallthru
        _
    $region12: #{basic_block_forward.1} parent=5 // pred_fallthru
      _
    %p199 = scmp.lt.s32.totalorder %s12, 2
    // Predicated region
    $region33: #{basic_block_forward.1} parent=5 // pred_check
      %p200 = pneg %p199
    $region34: #{basic_block_forward.1} parent=5 // pred_check_branch
      %202 = sbr.rel (%p200) target = $region36
    $region35: #{basic_block_forward.1} parent=5 // pred_region
      // Predicated region
      $region37: #{basic_block_forward.1} parent=35 // pred_check
        %p203 = pneg %p32
      $region38: #{basic_block_forward.1} parent=35 // pred_check_branch
        %205 = sbr.rel (%p203) target = $region40
      $region39: #{basic_block_forward.1} parent=35 // pred_region
        %p206 = scmp.lt.s32.totalorder %s12, 1
        %s207 = scalar_select %p206, %s12, 1
        %s208 = smul.addr %s207, 2
        %s209 = smul.addr %s208, 2
        %s210 = scalar_lea.vmem %s0, %s209
      $region40: #{basic_block_forward.1} parent=35 // pred_fallthru
        _
    $region36: #{basic_block_forward.1} parent=5 // pred_fallthru
      _
    %p211 = scmp.le.s32.totalorder 1, %s12
    %p212 = scmp.lt.s32.totalorder %s12, 3
    %p213 = pnand %p211, %p212
    %p214 = pneg %p213
    // Predicated region
    $region41: #{basic_block_forward.1} parent=5 // pred_check
      _
    $region42: #{basic_block_forward.1} parent=5 // pred_check_branch
      %216 = sbr.rel (%p213) target = $region44
    $region43: #{basic_block_forward.1} parent=5 // pred_region
      %s217 = ssub.s32 %s12, 1
      %p218 = scmp.lt.s32.totalorder %s17, 1
      %s219 = scalar_select %p218, %s17, 1
      %s220 = smul.addr %s219, 2
      %s221 = smul.addr %s220, 2
      %s222 = scalar_lea.vmem %s0, %s221
      %p223 = pneg %p38
      %p224 = pneg %p35
      %p225 = pneg %p59
      %p226 = pneg %p56
      %p227 = pneg %p80
      %p228 = pneg %p77
      %p229 = pneg %p101
      %p230 = pneg %p98
      %p231 = pneg %p122
      %p232 = pneg %p119
      %p233 = pneg %p143
      %p234 = pneg %p140
      %p235 = pneg %p169
      %p236 = pneg %p166
      %p237 = scmp.lt.s32.totalorder %s17, 1
      %s238 = scalar_select %p237, %s17, 1
      %s239 = smul.addr %s238, 2
      %s240 = smul.addr %s239, 2
      %s241 = scalar_lea.vmem %s6, %s240
      %p242 = scmp.lt.s32.totalorder %s17, 1
      %s243 = scalar_select %p242, %s17, 1
      %s244 = smul.addr %s243, 2
      %s245 = smul.addr %s244, 2
      %s246 = scalar_lea.vmem %s0, %s245
      %p247 = scmp.lt.s32.totalorder %s17, 1
      %s248 = scalar_select %p247, %s17, 1
      %s249 = smul.addr %s248, 2
      %s250 = smul.addr %s249, 2
      %s251 = scalar_lea.vmem %s6, %s250
      %v255 = vld [vmem:[%s2] sm:$0x3]
      %v256 = vld [vmem:[%s4] sm:$0x3]
      %v257 = vld [vmem:[%s3] sm:$0xf]
      %v258 = vld [vmem:[%s5] sm:$0xf]
      %v259 = vld [vmem:[%s1] ss:$8 sm:$0x3]
      %vm260 = vcmp.ne.f32.partialorder %v259, 0.0
      %s261 = scalar_lea.vmem %s1, 1
      %v262 = vld [vmem:[%s261] ss:$8 sm:$0x3]
      %vm263 = vcmp.ne.f32.partialorder %v262, 0.0
      %s264 = scalar_lea.vmem %s1, 2
      %v265 = vld [vmem:[%s264] ss:$8 sm:$0x3]
      %vm266 = vcmp.ne.f32.partialorder %v265, 0.0
      %s267 = scalar_lea.vmem %s1, 3
      %v268 = vld [vmem:[%s267] ss:$8 sm:$0x3]
      %vm269 = vcmp.ne.f32.partialorder %v268, 0.0
      %s270 = scalar_lea.vmem %s1, 5
      %v271 = vld [vmem:[%s270] ss:$8 sm:$0x3]
      %vm272 = vcmp.ne.f32.partialorder %v271, 0.0
      %s273 = scalar_lea.vmem %s1, 6
      %v274 = vld [vmem:[%s273] ss:$8 sm:$0x3]
      %vm275 = vcmp.ne.f32.partialorder %v274, 0.0
      %s276 = scalar_lea.vmem %s1, 7
      %v277 = vld [vmem:[%s276] ss:$8 sm:$0x3]
      %vm278 = vcmp.ne.f32.partialorder %v277, 0.0
      %s279 = scalar_lea.vmem %s1, 16
      %v280 = vld [vmem:[%s279] ss:$8 sm:$0x3]
      %vm281 = vcmp.ne.f32.partialorder %v280, 0.0
      %v282 = vld [vmem:[%s246] sm:$0xf]
      %v285 = vunpack.c.l.s4 1983009808
      %v286 = vunpack.c.0.s8 %v285
      %v287 = vlaneseq
      %v288 = vshrl.u32 %v287, 7
      %v289 = vsub.s32 %v286, %v288
      %v290 = vrot.slane %v282, %v289
      %v291 = vcombine.high %v290, %v290
      %292 = vrot.lane.b32.xlu0 %v291, 17
      %v293 = vpop.permute.xlu0 %292
      %294 = vrot.lane.b32.xlu0 %v290, 17
      %v295 = vpop.permute.xlu0 %294
      %vm296 = vcmask 138240
      %v297 = vsel %vm296, %v295, %v293
      %vm299 = vcmask 138240
      %v302 = vsel %vm299, %v293, %v295
      %v304 = vsel %vm260, 1, 0
      %v305 = vlaneseq
      %v306 = vshrl.u32 %v305, 7
      %v307 = vsub.s32 0, %v306
      %v308 = vrot.slane %v304, %v307
      %v309 = vlaneseq
      %v310 = vshrl.u32 %v309, 7
      %v311 = vsub.s32 1, %v310
      %v312 = vrot.slane %v304, %v311
      %vm313 = vcmp.eq.s32.totalorder %v308, 1
      %vm314 = vcmp.eq.s32.totalorder %v312, 1
      %vm315 = vmpackc.low %vm314, %vm313
      %v316 = vsel %vm315, 65537, 0
      %v317 = vlaneseq
      %v318 = vshrl.u32 %v317, 7
      %v319 = vsub.s32 0, %v318
      %v320 = vrot.slane %v316, %v319
      %v321 = vlaneseq
      %v322 = vshrl.u32 %v321, 7
      %v323 = vsub.s32 4, %v322
      %v324 = vrot.slane %v316, %v323
      %vm325 = vcmp.ne.s16.totalorder %v320, 0
      %vm326 = vcmp.ne.s16.totalorder %v324, 0
      %v327 = vsel %vm325, %v302, 0
      %v328 = vsel %vm326, %v297, 0
      %329 = vrot.lane.b32.xlu0 %v291, 16
      %v330 = vpop.permute.xlu0 %329
      %331 = vrot.lane.b32.xlu0 %v290, 16
      %v332 = vpop.permute.xlu0 %331
      %vm333 = vcmask 130048
      %v334 = vsel %vm333, %v332, %v330
      %vm336 = vcmask 130048
      %v339 = vsel %vm336, %v330, %v332
      %v341 = vsel %vm263, 1, 0
      %v342 = vlaneseq
      %v343 = vshrl.u32 %v342, 7
      %v344 = vsub.s32 0, %v343
      %v345 = vrot.slane %v341, %v344
      %v346 = vlaneseq
      %v347 = vshrl.u32 %v346, 7
      %v348 = vsub.s32 1, %v347
      %v349 = vrot.slane %v341, %v348
      %vm350 = vcmp.eq.s32.totalorder %v345, 1
      %vm351 = vcmp.eq.s32.totalorder %v349, 1
      %vm352 = vmpackc.low %vm351, %vm350
      %v353 = vsel %vm352, 65537, 0
      %v354 = vlaneseq
      %v355 = vshrl.u32 %v354, 7
      %v356 = vsub.s32 0, %v355
      %v357 = vrot.slane %v353, %v356
      %v358 = vlaneseq
      %v359 = vshrl.u32 %v358, 7
      %v360 = vsub.s32 4, %v359
      %v361 = vrot.slane %v353, %v360
      %vm362 = vcmp.ne.s16.totalorder %v357, 0
      %vm363 = vcmp.ne.s16.totalorder %v361, 0
      %v364 = vsel %vm362, %v339, 0
      %v365 = vsel %vm363, %v334, 0
      %366 = vrot.lane.b32.xlu0 %v291, 15
      %v367 = vpop.permute.xlu0 %366
      %368 = vrot.lane.b32.xlu0 %v290, 15
      %v369 = vpop.permute.xlu0 %368
      %vm370 = vcmask 121856
      %v371 = vsel %vm370, %v369, %v367
      %vm373 = vcmask 121856
      %v376 = vsel %vm373, %v367, %v369
      %v378 = vsel %vm266, 1, 0
      %v379 = vlaneseq
      %v380 = vshrl.u32 %v379, 7
      %v381 = vsub.s32 0, %v380
      %v382 = vrot.slane %v378, %v381
      %v383 = vlaneseq
      %v384 = vshrl.u32 %v383, 7
      %v385 = vsub.s32 1, %v384
      %v386 = vrot.slane %v378, %v385
      %vm387 = vcmp.eq.s32.totalorder %v382, 1
      %vm388 = vcmp.eq.s32.totalorder %v386, 1
      %vm389 = vmpackc.low %vm388, %vm387
      %v390 = vsel %vm389, 65537, 0
      %v391 = vlaneseq
      %v392 = vshrl.u32 %v391, 7
      %v393 = vsub.s32 0, %v392
      %v394 = vrot.slane %v390, %v393
      %v395 = vlaneseq
      %v396 = vshrl.u32 %v395, 7
      %v397 = vsub.s32 4, %v396
      %v398 = vrot.slane %v390, %v397
      %vm399 = vcmp.ne.s16.totalorder %v394, 0
      %vm400 = vcmp.ne.s16.totalorder %v398, 0
      %v401 = vsel %vm399, %v376, 0
      %v402 = vsel %vm400, %v371, 0
      %403 = vrot.lane.b32.xlu0 %v291, 1
      %v404 = vpop.permute.xlu0 %403
      %405 = vrot.lane.b32.xlu0 %v290, 1
      %v406 = vpop.permute.xlu0 %405
      %vm407 = vcmask 7168
      %v408 = vsel %vm407, %v406, %v404
      %vm410 = vcmask 7168
      %v413 = vsel %vm410, %v404, %v406
      %v415 = vsel %vm269, 1, 0
      %v416 = vlaneseq
      %v417 = vshrl.u32 %v416, 7
      %v418 = vsub.s32 0, %v417
      %v419 = vrot.slane %v415, %v418
      %v420 = vlaneseq
      %v421 = vshrl.u32 %v420, 7
      %v422 = vsub.s32 1, %v421
      %v423 = vrot.slane %v415, %v422
      %vm424 = vcmp.eq.s32.totalorder %v419, 1
      %vm425 = vcmp.eq.s32.totalorder %v423, 1
      %vm426 = vmpackc.low %vm425, %vm424
      %v427 = vsel %vm426, 65537, 0
      %v428 = vlaneseq
      %v429 = vshrl.u32 %v428, 7
      %v430 = vsub.s32 0, %v429
      %v431 = vrot.slane %v427, %v430
      %v432 = vlaneseq
      %v433 = vshrl.u32 %v432, 7
      %v434 = vsub.s32 4, %v433
      %v435 = vrot.slane %v427, %v434
      %vm436 = vcmp.ne.s16.totalorder %v431, 0
      %vm437 = vcmp.ne.s16.totalorder %v435, 0
      %v438 = vsel %vm436, %v413, 0
      %v439 = vsel %vm437, %v408, 0
      %440 = vrot.lane.b32.xlu0 %v290, 127
      %v441 = vpop.permute.xlu0 %440
      %442 = vrot.lane.b32.xlu0 %v291, 127
      %v443 = vpop.permute.xlu0 %442
      %vm444 = vcmask 1039360
      %v445 = vsel %vm444, %v441, %v443
      %vm447 = vcmask 1039360
      %v450 = vsel %vm447, %v443, %v441
      %v452 = vsel %vm272, 1, 0
      %v453 = vlaneseq
      %v454 = vshrl.u32 %v453, 7
      %v455 = vsub.s32 0, %v454
      %v456 = vrot.slane %v452, %v455
      %v457 = vlaneseq
      %v458 = vshrl.u32 %v457, 7
      %v459 = vsub.s32 1, %v458
      %v460 = vrot.slane %v452, %v459
      %vm461 = vcmp.eq.s32.totalorder %v456, 1
      %vm462 = vcmp.eq.s32.totalorder %v460, 1
      %vm463 = vmpackc.low %vm462, %vm461
      %v464 = vsel %vm463, 65537, 0
      %v465 = vlaneseq
      %v466 = vshrl.u32 %v465, 7
      %v467 = vsub.s32 0, %v466
      %v468 = vrot.slane %v464, %v467
      %v469 = vlaneseq
      %v470 = vshrl.u32 %v469, 7
      %v471 = vsub.s32 4, %v470
      %v472 = vrot.slane %v464, %v471
      %vm473 = vcmp.ne.s16.totalorder %v468, 0
      %vm474 = vcmp.ne.s16.totalorder %v472, 0
      %v475 = vsel %vm473, %v445, 0
      %v476 = vsel %vm474, %v450, 0
      %477 = vrot.lane.b32.xlu0 %v290, 113
      %v478 = vpop.permute.xlu0 %477
      %479 = vrot.lane.b32.xlu0 %v291, 113
      %v480 = vpop.permute.xlu0 %479
      %vm481 = vcmask 924672
      %v482 = vsel %vm481, %v478, %v480
      %vm484 = vcmask 924672
      %v487 = vsel %vm484, %v480, %v478
      %v489 = vsel %vm275, 1, 0
      %v490 = vlaneseq
      %v491 = vshrl.u32 %v490, 7
      %v492 = vsub.s32 0, %v491
      %v493 = vrot.slane %v489, %v492
      %v494 = vlaneseq
      %v495 = vshrl.u32 %v494, 7
      %v496 = vsub.s32 1, %v495
      %v497 = vrot.slane %v489, %v496
      %vm498 = vcmp.eq.s32.totalorder %v493, 1
      %vm499 = vcmp.eq.s32.totalorder %v497, 1
      %vm500 = vmpackc.low %vm499, %vm498
      %v501 = vsel %vm500, 65537, 0
      %v502 = vlaneseq
      %v503 = vshrl.u32 %v502, 7
      %v504 = vsub.s32 0, %v503
      %v505 = vrot.slane %v501, %v504
      %v506 = vlaneseq
      %v507 = vshrl.u32 %v506, 7
      %v508 = vsub.s32 4, %v507
      %v509 = vrot.slane %v501, %v508
      %vm510 = vcmp.ne.s16.totalorder %v505, 0
      %vm511 = vcmp.ne.s16.totalorder %v509, 0
      %v512 = vsel %vm510, %v482, 0
      %v513 = vsel %vm511, %v487, 0
      %514 = vrot.lane.b32.xlu0 %v290, 112
      %v515 = vpop.permute.xlu0 %514
      %516 = vrot.lane.b32.xlu0 %v291, 112
      %v517 = vpop.permute.xlu0 %516
      %vm518 = vcmask 916480
      %v519 = vsel %vm518, %v515, %v517
      %vm521 = vcmask 916480
      %v524 = vsel %vm521, %v517, %v515
      %v526 = vsel %vm278, 1, 0
      %v527 = vlaneseq
      %v528 = vshrl.u32 %v527, 7
      %v529 = vsub.s32 0, %v528
      %v530 = vrot.slane %v526, %v529
      %v531 = vlaneseq
      %v532 = vshrl.u32 %v531, 7
      %v533 = vsub.s32 1, %v532
      %v534 = vrot.slane %v526, %v533
      %vm535 = vcmp.eq.s32.totalorder %v530, 1
      %vm536 = vcmp.eq.s32.totalorder %v534, 1
      %vm537 = vmpackc.low %vm536, %vm535
      %v538 = vsel %vm537, 65537, 0
      %v539 = vlaneseq
      %v540 = vshrl.u32 %v539, 7
      %v541 = vsub.s32 0, %v540
      %v542 = vrot.slane %v538, %v541
      %v543 = vlaneseq
      %v544 = vshrl.u32 %v543, 7
      %v545 = vsub.s32 4, %v544
      %v546 = vrot.slane %v538, %v545
      %vm547 = vcmp.ne.s16.totalorder %v542, 0
      %vm548 = vcmp.ne.s16.totalorder %v546, 0
      %v549 = vsel %vm547, %v519, 0
      %v550 = vsel %vm548, %v524, 0
      %551 = vrot.lane.b32.xlu0 %v290, 111
      %v552 = vpop.permute.xlu0 %551
      %553 = vrot.lane.b32.xlu0 %v291, 111
      %v554 = vpop.permute.xlu0 %553
      %vm555 = vcmask 908288
      %v556 = vsel %vm555, %v552, %v554
      %vm558 = vcmask 908288
      %v561 = vsel %vm558, %v554, %v552
      %v563 = vsel %vm281, 1, 0
      %v564 = vlaneseq
      %v565 = vshrl.u32 %v564, 7
      %v566 = vsub.s32 0, %v565
      %v567 = vrot.slane %v563, %v566
      %v568 = vlaneseq
      %v569 = vshrl.u32 %v568, 7
      %v570 = vsub.s32 1, %v569
      %v571 = vrot.slane %v563, %v570
      %vm572 = vcmp.eq.s32.totalorder %v567, 1
      %vm573 = vcmp.eq.s32.totalorder %v571, 1
      %vm574 = vmpackc.low %vm573, %vm572
      %v575 = vsel %vm574, 65537, 0
      %v576 = vlaneseq
      %v577 = vshrl.u32 %v576, 7
      %v578 = vsub.s32 0, %v577
      %v579 = vrot.slane %v575, %v578
      %v580 = vlaneseq
      %v581 = vshrl.u32 %v580, 7
      %v582 = vsub.s32 4, %v581
      %v583 = vrot.slane %v575, %v582
      %vm584 = vcmp.ne.s16.totalorder %v579, 0
      %vm585 = vcmp.ne.s16.totalorder %v583, 0
      %v586 = vsel %vm584, %v556, 0
      %v587 = vsel %vm585, %v561, 0
      %v590 = vrot.slane %v364, 6
      %v591 = vrot.slane %v365, 6
      %v594 = vrot.slane %v401, 4
      %v595 = vrot.slane %v402, 4
      %v598 = vrot.slane %v438, 2
      %v599 = vrot.slane %v439, 2
      %v602 = vrot.slane %v475, 6
      %v603 = vrot.slane %v476, 6
      %v606 = vrot.slane %v512, 4
      %v607 = vrot.slane %v513, 4
      %v610 = vrot.slane %v549, 2
      %v611 = vrot.slane %v550, 2
      %vm612 = vcmask 1041408
      %v615 = vsel %vm612, %v327, %v590
      %v618 = vsel %vm612, %v328, %v591
      %vm619 = vcmask 1043456
      %v621 = vsel %vm619, %v615, %v594
      %v623 = vsel %vm619, %v618, %v595
      %vm624 = vcmask 1045504
      %v626 = vsel %vm624, %v621, %v598
      %v629 = vsel %vm624, %v623, %v599
      %v633 = vsel %vm612, %v290, %v602
      %v636 = vsel %vm612, %v291, %v603
      %v638 = vsel %vm619, %v633, %v606
      %v640 = vsel %vm619, %v636, %v607
      %v642 = vsel %vm624, %v638, %v610
      %v645 = vsel %vm624, %v640, %v611
      %648 = vset.pattern.permute.xlu0 0
      %649 = vperm.xlu0 %648, %v257
      %v650 = vpop.permute.xlu0 %649
      %vm652 = vcmask 293888
      %v654 = vsel %vm652, %v255, 0
      %v657 = vsel %vm612, %v586, 0
      %v660 = vsel %vm612, %v587, 0
      %662 = vmatprep.subr.bf16.mxu0 %v629
      %663 = vmatpush1.bf16.msra.mxu0 %v626
      %664 = vmatprep.subr.bf16.mxu0 %v645
      %665 = vmatpush1.bf16.msra.mxu0 %v642
      %666 = vmatprep.subr.bf16.mxu0 %v660
      %667 = vmatpush1.bf16.msra.mxu0 %v657
      %668 = vmatprep.subr.bf16.mxu0 0
      %669 = vmatpush1.bf16.msra.mxu0 0
      %670 = vmatprep.subr.bf16.mxu0 0
      %671 = vmatpush1.bf16.msra.mxu0 0
      %672 = vmatprep.subr.bf16.mxu0 0
      %673 = vmatpush1.bf16.msra.mxu0 0
      %674 = vmatprep.subr.bf16.mxu0 0
      %675 = vmatpush1.bf16.msra.mxu0 0
      %676 = vmatprep.subr.bf16.mxu0 0
      %677 = vmatpush1.bf16.msra.mxu0 0
      %678 = vmatprep.subr.bf16.mxu0 0
      %679 = vmatpush1.bf16.msra.mxu0 0
      %680 = vmatprep.subr.bf16.mxu0 0
      %681 = vmatpush1.bf16.msra.mxu0 0
      %682 = vmatprep.subr.bf16.mxu0 0
      %683 = vmatpush1.bf16.msra.mxu0 0
      %684 = vmatprep.subr.bf16.mxu0 0
      %685 = vmatpush1.bf16.msra.mxu0 0
      %686 = vmatprep.subr.bf16.mxu0 0
      %687 = vmatpush1.bf16.msra.mxu0 0
      %688 = vmatprep.subr.bf16.mxu0 0
      %689 = vmatpush1.bf16.msra.mxu0 0
      %690 = vmatprep.subr.bf16.mxu0 0
      %691 = vmatpush1.bf16.msra.mxu0 0
      %692 = vmatprep.subr.bf16.mxu0 0
      %693 = vmatpush1.bf16.msra.mxu0 0
      %694 = vmatprep.mubr.bf16.mxu0 0
      %695 = vmatmul.mubr.bf16.gmra.mrb[0].mxu0 %v654
      %v696 = vpop.f32.mrb[0].mxu0
      %v697 = vadd.f32 %v650, %v696
      %v698 = vpop.f32.mrb[0].mxu0
      %v699 = vadd.f32 %v650, %v698
      %v700 = vpop.f32.mrb[0].mxu0
      %v701 = vpop.f32.mrb[0].mxu0
      %702 = vdwg.mxu0
      %v703 = vmax.f32 %v697, 0.0
      %v704 = vmax.f32 %v699, 0.0
      %v705 = vpack.c.bf16 %v703, %v703
      %v706 = vpack.c.bf16 %v704, %v704
      %708 = vrot.lane.b32.xlu0 %v706, 17
      %v709 = vpop.permute.xlu0 %708
      %711 = vrot.lane.b32.xlu0 %v705, 17
      %v712 = vpop.permute.xlu0 %711
      %v713 = vsel %vm296, %v712, %v709
      %v717 = vsel %vm299, %v709, %v712
      %v719 = vsel %vm325, %v717, 0
      %v720 = vsel %vm326, %v713, 0
      %721 = vrot.lane.b32.xlu0 %v706, 16
      %v722 = vpop.permute.xlu0 %721
      %723 = vrot.lane.b32.xlu0 %v705, 16
      %v724 = vpop.permute.xlu0 %723
      %v725 = vsel %vm333, %v724, %v722
      %v729 = vsel %vm336, %v722, %v724
      %v731 = vsel %vm362, %v729, 0
      %v732 = vsel %vm363, %v725, 0
      %733 = vrot.lane.b32.xlu0 %v706, 15
      %v734 = vpop.permute.xlu0 %733
      %735 = vrot.lane.b32.xlu0 %v705, 15
      %v736 = vpop.permute.xlu0 %735
      %v737 = vsel %vm370, %v736, %v734
      %v741 = vsel %vm373, %v734, %v736
      %v743 = vsel %vm399, %v741, 0
      %v744 = vsel %vm400, %v737, 0
      %745 = vrot.lane.b32.xlu0 %v706, 1
      %v746 = vpop.permute.xlu0 %745
      %747 = vrot.lane.b32.xlu0 %v705, 1
      %v748 = vpop.permute.xlu0 %747
      %v749 = vsel %vm407, %v748, %v746
      %v753 = vsel %vm410, %v746, %v748
      %v755 = vsel %vm436, %v753, 0
      %v756 = vsel %vm437, %v749, 0
      %757 = vrot.lane.b32.xlu0 %v705, 127
      %v758 = vpop.permute.xlu0 %757
      %759 = vrot.lane.b32.xlu0 %v706, 127
      %v760 = vpop.permute.xlu0 %759
      %v761 = vsel %vm444, %v758, %v760
      %v765 = vsel %vm447, %v760, %v758
      %v767 = vsel %vm473, %v761, 0
      %v768 = vsel %vm474, %v765, 0
      %769 = vrot.lane.b32.xlu0 %v705, 113
      %v770 = vpop.permute.xlu0 %769
      %771 = vrot.lane.b32.xlu0 %v706, 113
      %v772 = vpop.permute.xlu0 %771
      %v773 = vsel %vm481, %v770, %v772
      %v777 = vsel %vm484, %v772, %v770
      %v779 = vsel %vm510, %v773, 0
      %v780 = vsel %vm511, %v777, 0
      %781 = vrot.lane.b32.xlu0 %v705, 112
      %v782 = vpop.permute.xlu0 %781
      %783 = vrot.lane.b32.xlu0 %v706, 112
      %v784 = vpop.permute.xlu0 %783
      %v785 = vsel %vm518, %v782, %v784
      %v789 = vsel %vm521, %v784, %v782
      %v791 = vsel %vm547, %v785, 0
      %v792 = vsel %vm548, %v789, 0
      %793 = vrot.lane.b32.xlu0 %v705, 111
      %v794 = vpop.permute.xlu0 %793
      %795 = vrot.lane.b32.xlu0 %v706, 111
      %v796 = vpop.permute.xlu0 %795
      %v797 = vsel %vm555, %v794, %v796
      %v801 = vsel %vm558, %v796, %v794
      %v803 = vsel %vm584, %v797, 0
      %v804 = vsel %vm585, %v801, 0
      %v807 = vrot.slane %v731, 6
      %v808 = vrot.slane %v732, 6
      %v811 = vrot.slane %v743, 4
      %v812 = vrot.slane %v744, 4
      %v815 = vrot.slane %v755, 2
      %v816 = vrot.slane %v756, 2
      %v819 = vrot.slane %v767, 6
      %v820 = vrot.slane %v768, 6
      %v823 = vrot.slane %v779, 4
      %v824 = vrot.slane %v780, 4
      %v827 = vrot.slane %v791, 2
      %v828 = vrot.slane %v792, 2
      %v831 = vsel %vm612, %v719, %v807
      %v834 = vsel %vm612, %v720, %v808
      %v836 = vsel %vm619, %v831, %v811
      %v838 = vsel %vm619, %v834, %v812
      %v840 = vsel %vm624, %v836, %v815
      %v843 = vsel %vm624, %v838, %v816
      %v847 = vsel %vm612, %v705, %v819
      %v850 = vsel %vm612, %v706, %v820
      %v852 = vsel %vm619, %v847, %v823
      %v854 = vsel %vm619, %v850, %v824
      %v856 = vsel %vm624, %v852, %v827
      %v859 = vsel %vm624, %v854, %v828
      %862 = vset.pattern.permute.xlu0 0
      %863 = vperm.xlu0 %862, %v258
      %v864 = vpop.permute.xlu0 %863
      %v867 = vsel %vm652, %v256, 0
      %v870 = vsel %vm612, %v803, 0
      %v873 = vsel %vm612, %v804, 0
      %875 = vmatprep.subr.bf16.mxu0 %v843
      %876 = vmatpush1.bf16.msra.mxu0 %v840
      %877 = vmatprep.subr.bf16.mxu0 %v859
      %878 = vmatpush1.bf16.msra.mxu0 %v856
      %879 = vmatprep.subr.bf16.mxu0 %v873
      %880 = vmatpush1.bf16.msra.mxu0 %v870
      %881 = vmatprep.subr.bf16.mxu0 0
      %882 = vmatpush1.bf16.msra.mxu0 0
      %883 = vmatprep.subr.bf16.mxu0 0
      %884 = vmatpush1.bf16.msra.mxu0 0
      %885 = vmatprep.subr.bf16.mxu0 0
      %886 = vmatpush1.bf16.msra.mxu0 0
      %887 = vmatprep.subr.bf16.mxu0 0
      %888 = vmatpush1.bf16.msra.mxu0 0
      %889 = vmatprep.subr.bf16.mxu0 0
      %890 = vmatpush1.bf16.msra.mxu0 0
      %891 = vmatprep.subr.bf16.mxu0 0
      %892 = vmatpush1.bf16.msra.mxu0 0
      %893 = vmatprep.subr.bf16.mxu0 0
      %894 = vmatpush1.bf16.msra.mxu0 0
      %895 = vmatprep.subr.bf16.mxu0 0
      %896 = vmatpush1.bf16.msra.mxu0 0
      %897 = vmatprep.subr.bf16.mxu0 0
      %898 = vmatpush1.bf16.msra.mxu0 0
      %899 = vmatprep.subr.bf16.mxu0 0
      %900 = vmatpush1.bf16.msra.mxu0 0
      %901 = vmatprep.subr.bf16.mxu0 0
      %902 = vmatpush1.bf16.msra.mxu0 0
      %903 = vmatprep.subr.bf16.mxu0 0
      %904 = vmatpush1.bf16.msra.mxu0 0
      %905 = vmatprep.subr.bf16.mxu0 0
      %906 = vmatpush1.bf16.msra.mxu0 0
      %907 = vmatprep.mubr.bf16.mxu0 0
      %908 = vmatmul.mubr.bf16.gmra.mrb[0].mxu0 %v867
      %v909 = vpop.f32.mrb[0].mxu0
      %v910 = vadd.f32 %v864, %v909
      %v911 = vpop.f32.mrb[0].mxu0
      %v912 = vadd.f32 %v864, %v911
      %v913 = vpop.f32.mrb[0].mxu0
      %v914 = vpop.f32.mrb[0].mxu0
      %915 = vdwg.mxu0
      %v916 = vunpack.c.l.bf16 %v282
      %v918 = vcombine.high %v916, %v916
      %v920 = vadd.f32 %v910, %v916
      %v921 = vadd.f32 %v912, %v918
      %v922 = vmax.f32 %v920, 0.0
      %v923 = vmax.f32 %v921, 0.0
      %v924 = vpack.c.bf16 %v922, %v922
      %v925 = vpack.c.bf16 %v923, %v923
      %v928 = vcombine.low %v924, %v925
      %v930 = vunpack.c.l.s4 1983009808
      %v931 = vunpack.c.0.s8 %v930
      %v932 = vlaneseq
      %v933 = vshrl.u32 %v932, 7
      %v934 = vsub.s32 %v931, %v933
      %v935 = vrot.slane %v928, %v934
      %937 = vst [vmem:[%s251] sm:$0xf] %v935
      %p938 = scmp.lt.s32.totalorder %s17, 1
      %s939 = scalar_select %p938, %s17, 1
      %s940 = smul.addr %s939, 2
      %s941 = smul.addr %s940, 2
      %s942 = scalar_lea.vmem %s6, %s941
      // Predicated region
      $region45: #{basic_block_forward.1} parent=43 // pred_check
        %p943 = pneg %p166
      $region46: #{basic_block_forward.1} parent=43 // pred_check_branch
        %945 = sbr.rel (%p943) target = $region48
      $region47: #{basic_block_forward.1} parent=43 // pred_region
        _
      $region48: #{basic_block_forward.1} parent=43 // pred_fallthru
        _
    $region44: #{basic_block_forward.1} parent=5 // pred_fallthru
      _
    %p946 = scmp.le.s32.totalorder 2, %s12
    // Predicated region
    $region49: #{basic_block_forward.1} parent=5 // pred_check
      %p947 = pneg %p946
    $region50: #{basic_block_forward.1} parent=5 // pred_check_branch
      %949 = sbr.rel (%p947) target = $region52
    $region51: #{basic_block_forward.1} parent=5 // pred_region
      %s950 = ssub.s32 %s12, 2
      // Predicated region
      $region53: #{basic_block_forward.1} parent=51 // pred_check
        %p951 = pneg %p172
      $region54: #{basic_block_forward.1} parent=51 // pred_check_branch
        %953 = sbr.rel (%p951) target = $region56
      $region55: #{basic_block_forward.1} parent=51 // pred_region
        %p954 = scmp.lt.s32.totalorder %s18, 1
        %s955 = scalar_select %p954, %s18, 1
        %s956 = smul.addr %s955, 2
        %s957 = smul.addr %s956, 2
        %s958 = scalar_lea.vmem %s6, %s957
      $region56: #{basic_block_forward.1} parent=51 // pred_fallthru
        _
    $region52: #{basic_block_forward.1} parent=5 // pred_fallthru
      _
  $region6: #{basic_block_forward.1} parent=0 // loop_footer
    %s16 = sadd.s32 1, %s12
  $region7: #{basic_block_forward.1} parent=0 // loop_footer_branch
    %11 = sbr.rel target = $region3
  $region8: #{basic_block_forward.1} parent=0 // loop_exit
    _

</llo_original>
